<compile_context>
chip_gen: v7x
topology: tpu7x:2x2x1
jax: 0.10.0
libtpu: 0.0.40
codegen_flags: <defaults>
</compile_context>

<pallas_src>
import jax
import jax.numpy as jnp
import numpy as np
from jax.experimental import pallas as pl
from jax.experimental.pallas import tpu as pltpu

_LANES = 128
_NCORES = 2            # shard tile loop over 2 TensorCores on v7x; harmless elsewhere
_MAX_TILE_ROWS = 1024  # (1024, 128) f32 block = 512 KiB; 2 inputs x 2 buffers = 2 MiB


def _round_up(x, m):
    return ((x + m - 1) // m) * m


def _fs2_loss_kernel(mel_p_ref, mel_t_ref, sp_ref, st_ref, out_ref):
    """Grid = (core, tile).  Per-core out block (16, 128) f32:
         rows 0..7  : running partial sums of |mel_pred - mel_tgt|
         rows 8..10 : per-lane partial sums of (pred - log(tgt+1))^2 for
                      pitch / energy / duration (written once, core 0 only)
         rows 11..15: unused (zero)
    """
    t = pl.program_id(1)

    @pl.when(t == 0)
    def _init():
        out_ref[...] = jnp.zeros_like(out_ref)

    # ---- mel L1: accumulate raw |diff| partial sums (divide by N in wrapper) ----
    diff = mel_p_ref[...].astype(jnp.float32) - mel_t_ref[...].astype(jnp.float32)
    absd = jnp.abs(diff)                                     # (tile_rows, 128)
    out_ref[0:8, :] += jnp.sum(absd.reshape(-1, 8, _LANES), axis=0)

    # ---- pitch / energy / duration MSE partial sums (once, on core 0) ----
    @pl.when(jnp.logical_and(t == pl.num_programs(1) - 1,
                             pl.program_id(0) == 0))
    def _small():
        preds = sp_ref[...].astype(jnp.float32)              # (3, rows_s, 128)
        tgts = st_ref[...].astype(jnp.float32)
        d = preds - jnp.log(tgts + 1.0)
        out_ref[8:11, :] = jnp.sum(d * d, axis=1)            # (3, 128)


@jax.jit
def fastspeech2_loss(mel_predictions, log_pitch_predictions,
                     log_energy_predictions, log_duration_predictions,
                     mel_target, pitch_target, energy_target, duration_target):
    n_mel = mel_predictions.size
    n_bt = log_pitch_predictions.size

    # ---------- lane-dense mel slabs: (padded_rows, 128) ----------
    rows = -(-n_mel // _LANES)
    tile_rows = min(_MAX_TILE_ROWS, _round_up(rows, 8))
    padded_rows = _round_up(rows, _NCORES * tile_rows)
    padded_len = padded_rows * _LANES
    tiles_per_core = padded_rows // (_NCORES * tile_rows)

    def to_slab(x):
        flat = x.reshape(-1)
        if padded_len != n_mel:
            flat = jnp.pad(flat, (0, padded_len - n_mel))    # zero pad -> |diff| = 0
        return flat.reshape(padded_rows, _LANES)

    mel_p2 = to_slab(mel_predictions)
    mel_t2 = to_slab(mel_target)

    # ---------- packed small tensors: (3, rows_s, 128) ----------
    nbt_pad = _round_up(n_bt, _LANES)
    rows_s = nbt_pad // _LANES

    def pack(a, b, c):
        s = jnp.stack([a.reshape(-1).astype(jnp.float32),
                       b.reshape(-1).astype(jnp.float32),
                       c.reshape(-1).astype(jnp.float32)])
        if nbt_pad != n_bt:
            # pred pad = 0 and target pad = 0 -> diff = 0 - log(1) = 0
            s = jnp.pad(s, ((0, 0), (0, nbt_pad - n_bt)))
        return s.reshape(3, rows_s, _LANES)

    small_pred = pack(log_pitch_predictions, log_energy_predictions,
                      log_duration_predictions)
    small_tgt = pack(pitch_target, energy_target, duration_target)

    mel_idx = lambda c, t: (c * tiles_per_core + t, 0)

    partials = pl.pallas_call(
        _fs2_loss_kernel,
        out_shape=jax.ShapeDtypeStruct((_NCORES, 16, _LANES), jnp.float32),
        grid=(_NCORES, tiles_per_core),
        in_specs=[
            pl.BlockSpec((tile_rows, _LANES), mel_idx),
            pl.BlockSpec((tile_rows, _LANES), mel_idx),
            pl.BlockSpec((3, rows_s, _LANES), lambda c, t: (0, 0, 0)),
            pl.BlockSpec((3, rows_s, _LANES), lambda c, t: (0, 0, 0)),
        ],
        out_specs=pl.BlockSpec((None, 16, _LANES), lambda c, t: (c, 0, 0)),
        compiler_params=pltpu.CompilerParams(
            dimension_semantics=("parallel", "arbitrary"),
            vmem_limit_bytes=32 * 1024 * 1024),
    )(mel_p2, mel_t2, small_pred, small_tgt)

    # ---------- combine per-core partials; scale once by 1/N ----------
    mel_sum = jnp.sum(partials[:, 0:8, :])
    pitch_sum = jnp.sum(partials[:, 8, :])
    energy_sum = jnp.sum(partials[:, 9, :])
    dur_sum = jnp.sum(partials[:, 10, :])

    mel_loss = mel_sum * (1.0 / n_mel)
    pitch_loss = pitch_sum * (1.0 / n_bt)
    energy_loss = energy_sum * (1.0 / n_bt)
    duration_loss = dur_sum * (1.0 / n_bt)
    total_loss = mel_loss + duration_loss + pitch_loss + energy_loss
    return total_loss, mel_loss, pitch_loss, energy_loss, duration_loss


def _reference(mel_pred, log_pitch_pred, log_energy_pred, log_dur_pred,
               mel_tgt, pitch_tgt, energy_tgt, dur_tgt):
    mel_loss = jnp.mean(jnp.abs(mel_pred - mel_tgt))
    log_dur_tgt = jnp.log(dur_tgt.astype(jnp.float32) + 1.0)
    log_pitch_tgt = jnp.log(pitch_tgt.astype(jnp.float32) + 1.0)
    log_energy_tgt = jnp.log(energy_tgt + 1.0)
    pitch_loss = jnp.mean((log_pitch_pred - log_pitch_tgt) ** 2)
    energy_loss = jnp.mean((log_energy_pred - log_energy_tgt) ** 2)
    dur_loss = jnp.mean((log_dur_pred - log_dur_tgt) ** 2)
    total = mel_loss + dur_loss + pitch_loss + energy_loss
    return total, mel_loss, pitch_loss, energy_loss, dur_loss


if __name__ == "__main__":
    key = jax.random.PRNGKey(0)
    B, T, M = 2, 8, 32  # batch, sequence length, mel channels

    keys = jax.random.split(key, 8)
    mel_predictions = jax.random.normal(keys[0], (B, T, M), jnp.float32)
    mel_target = jax.random.normal(keys[1], (B, T, M), jnp.float32)

    log_pitch_predictions = jax.random.normal(keys[2], (B, T), jnp.float32)
    pitch_target = jax.random.uniform(keys[3], (B, T), jnp.float32, 0.0, 5.0)

    log_energy_predictions = jax.random.normal(keys[4], (B, T), jnp.float32)
    energy_target = jax.random.uniform(keys[5], (B, T), jnp.float32, 0.0, 5.0)

    log_duration_predictions = jax.random.normal(keys[6], (B, T), jnp.float32)
    duration_target = jax.random.randint(keys[7], (B, T), 0, 10, jnp.int32)

    result = fastspeech2_loss(
        mel_predictions, log_pitch_predictions, log_energy_predictions,
        log_duration_predictions, mel_target, pitch_target, energy_target,
        duration_target)
    result = jax.block_until_ready(result)

    ref = _reference(
        mel_predictions, log_pitch_predictions, log_energy_predictions,
        log_duration_predictions, mel_target, pitch_target, energy_target,
        duration_target)

    np.testing.assert_allclose(np.array(result), np.array(ref),
                               rtol=1e-5, atol=1e-5)
    print("KERNEL_OK")
</pallas_src>

<mosaic_0001>
module attributes {stable_mosaic.version = 11 : i64} {
  func.func @_fs2_loss_kernel(%arg0: i32, %arg1: i32, %arg2: memref<8x128xf32, #tpu.memory_space<vmem>>, %arg3: memref<8x128xf32, #tpu.memory_space<vmem>>, %arg4: memref<3x1x128xf32, #tpu.memory_space<vmem>>, %arg5: memref<3x1x128xf32, #tpu.memory_space<vmem>>, %arg6: memref<1x16x128xf32, #tpu.memory_space<vmem>>) attributes {dimension_semantics = [#tpu.dimension_semantics<parallel>, #tpu.dimension_semantics<arbitrary>], iteration_bounds = array<i64: 2, 1>, scalar_prefetch = 0 : i64, scratch_operands = 0 : i64, tpu.core_type = #tpu.core_type<tc>, window_params = [{transform_indices = @transform_0, window_bounds = array<i64: 8, 128>}, {transform_indices = @transform_1, window_bounds = array<i64: 8, 128>}, {pipeline_mode = #tpu.pipeline_mode<synchronous>, transform_indices = @transform_2, window_bounds = array<i64: 3, 1, 128>}, {pipeline_mode = #tpu.pipeline_mode<synchronous>, transform_indices = @transform_3, window_bounds = array<i64: 3, 1, 128>}, {transform_indices = @transform_4, window_bounds = array<i64: 1, 16, 128>}]} {
    %c0_i32 = arith.constant 0 : i32
    %0 = arith.cmpi eq, %arg1, %c0_i32 : i32
    %1 = arith.extui %0 : i1 to i32
    %c0_i32_0 = arith.constant 0 : i32
    %2 = arith.cmpi ne, %1, %c0_i32_0 : i32
    scf.if %2 {
      %cst_13 = arith.constant 0.000000e+00 : f32
      %20 = vector.broadcast %cst_13 : f32 to vector<16x128xf32>
      %c0_14 = arith.constant 0 : index
      %c0_15 = arith.constant 0 : index
      %c0_16 = arith.constant 0 : index
      %21 = vector.load %arg6[%c0_14, %c0_15, %c0_16] : memref<1x16x128xf32, #tpu.memory_space<vmem>>, vector<1x16x128xf32>
      %22 = vector.shape_cast %21 : vector<1x16x128xf32> to vector<16x128xf32>
      %23 = vector.shape_cast %20 : vector<16x128xf32> to vector<1x16x128xf32>
      tpu.vector_store %arg6[%c0_14, %c0_15, %c0_16], %23 {strides = array<i32>} : memref<1x16x128xf32, #tpu.memory_space<vmem>>, vector<1x16x128xf32>,
    } else {
    }
    %c0 = arith.constant 0 : index
    %c0_1 = arith.constant 0 : index
    %3 = vector.load %arg2[%c0, %c0_1] : memref<8x128xf32, #tpu.memory_space<vmem>>, vector<8x128xf32>
    %c0_2 = arith.constant 0 : index
    %c0_3 = arith.constant 0 : index
    %4 = vector.load %arg3[%c0_2, %c0_3] : memref<8x128xf32, #tpu.memory_space<vmem>>, vector<8x128xf32>
    %5 = arith.subf %3, %4 : vector<8x128xf32>
    %6 = math.absf %5 : vector<8x128xf32>
    %c0_4 = arith.constant 0 : index
    %c0_5 = arith.constant 0 : index
    %c0_6 = arith.constant 0 : index
    %7 = vector.load %arg6[%c0_4, %c0_5, %c0_6] : memref<1x16x128xf32, #tpu.memory_space<vmem>>, vector<1x8x128xf32>
    %8 = vector.shape_cast %7 : vector<1x8x128xf32> to vector<8x128xf32>
    %9 = vector.shape_cast %6 : vector<8x128xf32> to vector<1x8x128xf32>
    %cst = arith.constant dense<0.000000e+00> : vector<8x128xf32>
    %10 = vector.multi_reduction <add>, %9, %cst [0] : vector<1x8x128xf32> to vector<8x128xf32>
    %11 = arith.addf %8, %10 : vector<8x128xf32>
    %c0_7 = arith.constant 0 : index
    %c0_8 = arith.constant 0 : index
    %c0_9 = arith.constant 0 : index
    %12 = vector.load %arg6[%c0_7, %c0_8, %c0_9] : memref<1x16x128xf32, #tpu.memory_space<vmem>>, vector<1x8x128xf32>
    %13 = vector.shape_cast %12 : vector<1x8x128xf32> to vector<8x128xf32>
    %14 = vector.shape_cast %11 : vector<8x128xf32> to vector<1x8x128xf32>
    tpu.vector_store %arg6[%c0_7, %c0_8, %c0_9], %14 {strides = array<i32>} : memref<1x16x128xf32, #tpu.memory_space<vmem>>, vector<1x8x128xf32>,
    %c0_i32_10 = arith.constant 0 : i32
    %15 = arith.cmpi eq, %arg1, %c0_i32_10 : i32
    %c0_i32_11 = arith.constant 0 : i32
    %16 = arith.cmpi eq, %arg0, %c0_i32_11 : i32
    %17 = arith.andi %15, %16 : i1
    %18 = arith.extui %17 : i1 to i32
    %c0_i32_12 = arith.constant 0 : i32
    %19 = arith.cmpi ne, %18, %c0_i32_12 : i32
    scf.if %19 {
      %c0_13 = arith.constant 0 : index
      %c0_14 = arith.constant 0 : index
      %c0_15 = arith.constant 0 : index
      %20 = vector.load %arg4[%c0_13, %c0_14, %c0_15] : memref<3x1x128xf32, #tpu.memory_space<vmem>>, vector<3x1x128xf32>
      %c0_16 = arith.constant 0 : index
      %c0_17 = arith.constant 0 : index
      %c0_18 = arith.constant 0 : index
      %21 = vector.load %arg5[%c0_16, %c0_17, %c0_18] : memref<3x1x128xf32, #tpu.memory_space<vmem>>, vector<3x1x128xf32>
      %cst_19 = arith.constant 1.000000e+00 : f32
      %22 = vector.broadcast %cst_19 : f32 to vector<3x1x128xf32>
      %23 = arith.addf %21, %22 : vector<3x1x128xf32>
      %24 = math.log %23 : vector<3x1x128xf32>
      %25 = arith.subf %20, %24 : vector<3x1x128xf32>
      %26 = arith.mulf %25, %25 : vector<3x1x128xf32>
      %cst_20 = arith.constant dense<0.000000e+00> : vector<3x128xf32>
      %27 = vector.multi_reduction <add>, %26, %cst_20 [1] : vector<3x1x128xf32> to vector<3x128xf32>
      %c0_21 = arith.constant 0 : index
      %c8 = arith.constant 8 : index
      %c0_22 = arith.constant 0 : index
      %28 = vector.load %arg6[%c0_21, %c8, %c0_22] : memref<1x16x128xf32, #tpu.memory_space<vmem>>, vector<1x3x128xf32>
      %29 = vector.shape_cast %28 : vector<1x3x128xf32> to vector<3x128xf32>
      %30 = vector.shape_cast %27 : vector<3x128xf32> to vector<1x3x128xf32>
      tpu.vector_store %arg6[%c0_21, %c8, %c0_22], %30 {strides = array<i32>} : memref<1x16x128xf32, #tpu.memory_space<vmem>>, vector<1x3x128xf32>,
    } else {
    }
    return
  }
  func.func @transform_0(%arg0: i32, %arg1: i32) -> (i32, i32) {
    %c1_i32 = arith.constant 1 : i32
    %0 = arith.muli %arg0, %c1_i32 : i32
    %1 = arith.addi %0, %arg1 : i32
    %c0_i32 = arith.constant 0 : i32
    %c0_i32_0 = arith.constant 0 : i32
    return %1, %c0_i32 : i32, i32
  }
  func.func @transform_1(%arg0: i32, %arg1: i32) -> (i32, i32) {
    %c1_i32 = arith.constant 1 : i32
    %0 = arith.muli %arg0, %c1_i32 : i32
    %1 = arith.addi %0, %arg1 : i32
    %c0_i32 = arith.constant 0 : i32
    %c0_i32_0 = arith.constant 0 : i32
    return %1, %c0_i32 : i32, i32
  }
  func.func @transform_2(%arg0: i32, %arg1: i32) -> (i32, i32, i32) {
    %c0_i32 = arith.constant 0 : i32
    %c0_i32_0 = arith.constant 0 : i32
    %c0_i32_1 = arith.constant 0 : i32
    %c0_i32_2 = arith.constant 0 : i32
    return %c0_i32, %c0_i32_0, %c0_i32_1 : i32, i32, i32
  }
  func.func @transform_3(%arg0: i32, %arg1: i32) -> (i32, i32, i32) {
    %c0_i32 = arith.constant 0 : i32
    %c0_i32_0 = arith.constant 0 : i32
    %c0_i32_1 = arith.constant 0 : i32
    %c0_i32_2 = arith.constant 0 : i32
    return %c0_i32, %c0_i32_0, %c0_i32_1 : i32, i32, i32
  }
  func.func @transform_4(%arg0: i32, %arg1: i32) -> (i32, i32, i32) {
    %c0_i32 = arith.constant 0 : i32
    %c0_i32_0 = arith.constant 0 : i32
    %c0_i32_1 = arith.constant 0 : i32
    return %arg0, %c0_i32, %c0_i32_0 : i32, i32, i32
  }
}

</mosaic_0001>

<llo_original>
// kernel: fastspeech2_loss.1
$region0: #{fastspeech2_loss.1}
  #allocation0 [shape = 'u32[]', space=smem, size = 0x4, offset = 0x4, fixed_abs, tag = 'smem constant byte address 0x4 - core index']
  #allocation1 [shape = 'u32[144,128]{1,0:T(1,128)}', space=vmem, size = 0x12000, scoped, tag = 'internal scratch']
  %s0 = inlined_call_operand.vmem [shape: f32[16,128], index: 0, kind: input, shape index: {}]
  %s1 = inlined_call_operand.vmem [shape: f32[16,128], index: 1, kind: input, shape index: {}]
  %s2 = inlined_call_operand.vmem [shape: f32[3,1,128], index: 2, kind: input, shape index: {}]
  %s3 = inlined_call_operand.vmem [shape: f32[3,1,128], index: 3, kind: input, shape index: {}]
  %s4 = inlined_call_operand.vmem [shape: f32[2,16,128], index: 4, kind: output, shape index: {}]
  %s5 = sld [smem:[#allocation0]]
  $region57: #{fastspeech2_loss.1} parent=0
    _
  %s7 = ssub.s32 1, %s5
  %s8 = scalar_select 0, %s7, %s5
  loop: start=0, step=1, limit=4
  $region2: #{fastspeech2_loss.1} parent=0 // loop_pre_header
    _
  $region3: #{fastspeech2_loss.1} parent=0 // loop_header
    %s10 = sphi 0, %s14
    %p11 = scmp.ge.s32.totalorder %s10, 4
    %s17 = sphi 0, %s29
    %s18 = sphi 0, %s25
    %s19 = sphi 0, %s17
    %s20 = sphi 0, %s18
    %s21 = sphi 0, %s19
    %s22 = sphi 0, %s20
    %s34 = sphi 0, %s36
    %s37 = sphi 0, %s34
    %s38 = sphi 0, %s37
    %s54 = sphi 0, %s38
    %s62 = sphi 0, %s64
    %s65 = sphi 0, %s62
    %s66 = sphi 0, %s65
    %s82 = sphi 0, %s66
    %s86 = sphi 0, %s86
    %s88 = sphi 0, %s86
    %s89 = sphi 0, %s88
    %s103 = sphi 0, %s89
    %s107 = sphi 0, %s107
    %s109 = sphi 0, %s107
    %s110 = sphi 0, %s109
    %s124 = sphi 0, %s110
    %s130 = sphi 0, %s132
    %s133 = sphi 0, %s130
    %s134 = sphi 0, %s133
    %s150 = sphi 0, %s134
  $region4: #{fastspeech2_loss.1} parent=0 // loop_header_branch
    %13 = sbr.rel (%p11) target = $region8
  $region5: #{fastspeech2_loss.1} parent=0 // loop_body
    %s15 = ssub.s32 %s10, 1
    %s16 = ssub.s32 %s10, 2
    %s23 = sadd.s32 1, %s18
    %p24 = scmp.ge.s32.totalorder %s23, 1
    %s25 = scalar_select %p24, 0, %s23
    %s26 = sadd.s32 1, %s17
    %s27 = scalar_select %p24, %s26, %s17
    %p28 = scmp.ge.s32.totalorder %s27, 2
    %s29 = scalar_select %p28, 0, %s27
    %s30 = sadd.s32 %s17, %s18
    %s31 = sadd.s32 %s29, %s25
    %s32 = ssub.s32 %s30, %s31
    %p33 = scmp.eq.s32.totalorder %s32, 0
    %s35 = sadd.s32 %s34, 1
    %s36 = scalar_select %p33, %s34, %s35
    %p39 = pneg %p33
    %p40 = scmp.eq.s32.totalorder %s10, 1
    %p41 = por %p39, %p40
    %p42 = scmp.ne.s32.totalorder %s34, %s37
    %p43 = scmp.eq.s32.totalorder %s10, 0
    %p44 = por %p42, %p43
    %p45 = scmp.ne.s32.totalorder %s34, %s37
    %p46 = scmp.eq.s32.totalorder %s15, 1
    %p47 = por %p45, %p46
    %p48 = scmp.ne.s32.totalorder %s37, %s38
    %p49 = scmp.eq.s32.totalorder %s15, 0
    %p50 = por %p48, %p49
    %p51 = scmp.ne.s32.totalorder %s37, %s38
    %p52 = scmp.eq.s32.totalorder %s16, 1
    %p53 = por %p51, %p52
    %p55 = scmp.ne.s32.totalorder %s38, %s54
    %p56 = scmp.eq.s32.totalorder %s16, 0
    %p57 = por %p55, %p56
    %s58 = sadd.s32 %s17, %s18
    %s59 = sadd.s32 %s29, %s25
    %s60 = ssub.s32 %s58, %s59
    %p61 = scmp.eq.s32.totalorder %s60, 0
    %s63 = sadd.s32 %s62, 1
    %s64 = scalar_select %p61, %s62, %s63
    %p67 = pneg %p61
    %p68 = scmp.eq.s32.totalorder %s10, 1
    %p69 = por %p67, %p68
    %p70 = scmp.ne.s32.totalorder %s62, %s65
    %p71 = scmp.eq.s32.totalorder %s10, 0
    %p72 = por %p70, %p71
    %p73 = scmp.ne.s32.totalorder %s62, %s65
    %p74 = scmp.eq.s32.totalorder %s15, 1
    %p75 = por %p73, %p74
    %p76 = scmp.ne.s32.totalorder %s65, %s66
    %p77 = scmp.eq.s32.totalorder %s15, 0
    %p78 = por %p76, %p77
    %p79 = scmp.ne.s32.totalorder %s65, %s66
    %p80 = scmp.eq.s32.totalorder %s16, 1
    %p81 = por %p79, %p80
    %p83 = scmp.ne.s32.totalorder %s66, %s82
    %p84 = scmp.eq.s32.totalorder %s16, 0
    %p85 = por %p83, %p84
    %s87 = sadd.s32 %s86, 1
    %p90 = scmp.eq.s32.totalorder %s10, 1
    %p91 = scmp.ne.s32.totalorder %s86, %s88
    %p92 = scmp.eq.s32.totalorder %s10, 0
    %p93 = por %p91, %p92
    %p94 = scmp.ne.s32.totalorder %s86, %s88
    %p95 = scmp.eq.s32.totalorder %s15, 1
    %p96 = por %p94, %p95
    %p97 = scmp.ne.s32.totalorder %s88, %s89
    %p98 = scmp.eq.s32.totalorder %s15, 0
    %p99 = por %p97, %p98
    %p100 = scmp.ne.s32.totalorder %s88, %s89
    %p101 = scmp.eq.s32.totalorder %s16, 1
    %p102 = por %p100, %p101
    %p104 = scmp.ne.s32.totalorder %s89, %s103
    %p105 = scmp.eq.s32.totalorder %s16, 0
    %p106 = por %p104, %p105
    %s108 = sadd.s32 %s107, 1
    %p111 = scmp.eq.s32.totalorder %s10, 1
    %p112 = scmp.ne.s32.totalorder %s107, %s109
    %p113 = scmp.eq.s32.totalorder %s10, 0
    %p114 = por %p112, %p113
    %p115 = scmp.ne.s32.totalorder %s107, %s109
    %p116 = scmp.eq.s32.totalorder %s15, 1
    %p117 = por %p115, %p116
    %p118 = scmp.ne.s32.totalorder %s109, %s110
    %p119 = scmp.eq.s32.totalorder %s15, 0
    %p120 = por %p118, %p119
    %p121 = scmp.ne.s32.totalorder %s109, %s110
    %p122 = scmp.eq.s32.totalorder %s16, 1
    %p123 = por %p121, %p122
    %p125 = scmp.ne.s32.totalorder %s110, %s124
    %p126 = scmp.eq.s32.totalorder %s16, 0
    %p127 = por %p125, %p126
    %s128 = ssub.s32 %s17, %s29
    %p129 = scmp.eq.s32.totalorder %s128, 0
    %s131 = sadd.s32 %s130, 1
    %s132 = scalar_select %p129, %s130, %s131
    %p135 = pneg %p129
    %p136 = scmp.eq.s32.totalorder %s10, 1
    %p137 = por %p135, %p136
    %p138 = scmp.ne.s32.totalorder %s130, %s133
    %p139 = scmp.eq.s32.totalorder %s10, 0
    %p140 = por %p138, %p139
    %p141 = scmp.ne.s32.totalorder %s130, %s133
    %p142 = scmp.eq.s32.totalorder %s15, 1
    %p143 = por %p141, %p142
    %p144 = scmp.ne.s32.totalorder %s133, %s134
    %p145 = scmp.eq.s32.totalorder %s15, 0
    %p146 = por %p144, %p145
    %p147 = scmp.ne.s32.totalorder %s133, %s134
    %p148 = scmp.eq.s32.totalorder %s16, 1
    %p149 = por %p147, %p148
    %p151 = scmp.ne.s32.totalorder %s134, %s150
    %p152 = scmp.eq.s32.totalorder %s16, 0
    %p153 = por %p151, %p152
    %p154 = scmp.le.s32.totalorder 1, %s10
    %p155 = scmp.lt.s32.totalorder %s10, 3
    %p156 = pnand %p154, %p155
    %p157 = pneg %p156
    // Predicated region
    $region9: #{fastspeech2_loss.1} parent=5 // pred_check
      _
    $region10: #{fastspeech2_loss.1} parent=5 // pred_check_branch
      %159 = sbr.rel (%p156) target = $region12
    $region11: #{fastspeech2_loss.1} parent=5 // pred_region
      %s160 = ssub.s32 %s10, 1
      // Predicated region
      $region13: #{fastspeech2_loss.1} parent=11 // pred_check
        %p161 = pneg %p99
      $region14: #{fastspeech2_loss.1} parent=11 // pred_check_branch
        %163 = sbr.rel (%p161) target = $region16
      $region15: #{fastspeech2_loss.1} parent=11 // pred_region
        _
      $region16: #{fastspeech2_loss.1} parent=11 // pred_fallthru
        _
      // Predicated region
      $region17: #{fastspeech2_loss.1} parent=11 // pred_check
        %p164 = pneg %p120
      $region18: #{fastspeech2_loss.1} parent=11 // pred_check_branch
        %166 = sbr.rel (%p164) target = $region20
      $region19: #{fastspeech2_loss.1} parent=11 // pred_region
        _
      $region20: #{fastspeech2_loss.1} parent=11 // pred_fallthru
        _
    $region12: #{fastspeech2_loss.1} parent=5 // pred_fallthru
      _
    %p167 = scmp.lt.s32.totalorder %s10, 2
    // Predicated region
    $region21: #{fastspeech2_loss.1} parent=5 // pred_check
      %p168 = pneg %p167
    $region22: #{fastspeech2_loss.1} parent=5 // pred_check_branch
      %170 = sbr.rel (%p168) target = $region24
    $region23: #{fastspeech2_loss.1} parent=5 // pred_region
      // Predicated region
      $region25: #{fastspeech2_loss.1} parent=23 // pred_check
        %p171 = pneg %p44
      $region26: #{fastspeech2_loss.1} parent=23 // pred_check_branch
        %173 = sbr.rel (%p171) target = $region28
      $region27: #{fastspeech2_loss.1} parent=23 // pred_region
        %s174 = sadd.s32 %s17, %s18
        %p175 = scmp.lt.s32.totalorder %s174, 1
        %s176 = scalar_select %p175, %s174, 1
        %s177 = smul.addr %s176, 8
        %s178 = scalar_lea.vmem %s0, %s177
        %s179 = sadd.s32 %s17, %s18
      $region28: #{fastspeech2_loss.1} parent=23 // pred_fallthru
        _
      // Predicated region
      $region29: #{fastspeech2_loss.1} parent=23 // pred_check
        %p180 = pneg %p72
      $region30: #{fastspeech2_loss.1} parent=23 // pred_check_branch
        %182 = sbr.rel (%p180) target = $region32
      $region31: #{fastspeech2_loss.1} parent=23 // pred_region
        %s183 = sadd.s32 %s17, %s18
        %p184 = scmp.lt.s32.totalorder %s183, 1
        %s185 = scalar_select %p184, %s183, 1
        %s186 = smul.addr %s185, 8
        %s187 = scalar_lea.vmem %s1, %s186
        %s188 = sadd.s32 %s17, %s18
      $region32: #{fastspeech2_loss.1} parent=23 // pred_fallthru
        _
    $region24: #{fastspeech2_loss.1} parent=5 // pred_fallthru
      _
    %p189 = scmp.le.s32.totalorder 1, %s10
    %p190 = scmp.lt.s32.totalorder %s10, 3
    %p191 = pnand %p189, %p190
    %p192 = pneg %p191
    // Predicated region
    $region33: #{fastspeech2_loss.1} parent=5 // pred_check
      _
    $region34: #{fastspeech2_loss.1} parent=5 // pred_check_branch
      %194 = sbr.rel (%p191) target = $region36
    $region35: #{fastspeech2_loss.1} parent=5 // pred_region
      %s195 = ssub.s32 %s10, 1
      %s196 = sadd.s32 %s19, %s20
      %p197 = scmp.lt.s32.totalorder %s196, 1
      %s198 = scalar_select %p197, %s196, 1
      %s199 = smul.addr %s198, 8
      %s200 = scalar_lea.vmem %s0, %s199
      %p201 = pneg %p50
      %p202 = pneg %p47
      %s203 = sadd.s32 %s19, %s20
      %p204 = scmp.lt.s32.totalorder %s203, 1
      %s205 = scalar_select %p204, %s203, 1
      %s206 = smul.addr %s205, 8
      %s207 = scalar_lea.vmem %s1, %s206
      %p208 = pneg %p78
      %p209 = pneg %p75
      %p210 = pneg %p99
      %p211 = pneg %p96
      %p212 = pneg %p120
      %p213 = pneg %p117
      %p214 = pneg %p146
      %p215 = pneg %p143
      %p216 = scmp.lt.s32.totalorder %s19, 1
      %s217 = scalar_select %p216, %s19, 1
      %s218 = smul.addr %s217, 2
      %s219 = smul.addr %s218, 8
      %s220 = scalar_lea.vmem %s4, %s219
      %s221 = sadd.s32 %s19, %s20
      %p222 = scmp.lt.s32.totalorder %s221, 1
      %s223 = scalar_select %p222, %s221, 1
      %s224 = smul.addr %s223, 8
      %s225 = scalar_lea.vmem %s0, %s224
      %s226 = sadd.s32 %s19, %s20
      %s227 = sadd.s32 %s19, %s20
      %p228 = scmp.lt.s32.totalorder %s227, 1
      %s229 = scalar_select %p228, %s227, 1
      %s230 = smul.addr %s229, 8
      %s231 = scalar_lea.vmem %s1, %s230
      %s232 = sadd.s32 %s19, %s20
      %p233 = scmp.lt.s32.totalorder %s19, 1
      %s234 = scalar_select %p233, %s19, 1
      %s235 = smul.addr %s234, 2
      %s236 = smul.addr %s235, 8
      %s237 = scalar_lea.vmem %s4, %s236
      %p238 = scmp.eq.s32.totalorder %s20, 0
      // Predicated region
      $region37: #{fastspeech2_loss.1} parent=35 // pred_check
        %p239 = pneg %p238
      $region38: #{fastspeech2_loss.1} parent=35 // pred_check_branch
        %241 = sbr.rel (%p239) target = $region40
      $region39: #{fastspeech2_loss.1} parent=35 // pred_region
        %242 = vst [vmem:[%s237] sm:$0xff] 0.0
        %243 = vst [vmem:[%s237 + $0x8] sm:$0xff] 0.0
      $region40: #{fastspeech2_loss.1} parent=35 // pred_fallthru
        _
      %v244 = vld [vmem:[%s225] sm:$0xff]
      %v245 = vld [vmem:[%s231] sm:$0xff]
      %v246 = vsub.f32 %v244, %v245
      %v247 = vand.u32 2147483647, %v246
      %v248 = vld [vmem:[%s237] sm:$0xff]
      %v249 = vadd.f32 %v247, 0.0
      %v250 = vadd.f32 %v248, %v249
      %251 = vst [vmem:[%s237] sm:$0xff] %v250
      %p252 = scmp.eq.s32.totalorder %s19, 0
      %p253 = pnand %p238, %p252
      %p254 = pneg %p253
      // Predicated region
      $region41: #{fastspeech2_loss.1} parent=35 // pred_check
        _
      $region42: #{fastspeech2_loss.1} parent=35 // pred_check_branch
        %256 = sbr.rel (%p253) target = $region44
      $region43: #{fastspeech2_loss.1} parent=35 // pred_region
        %v257 = vld [vmem:[%s2] sm:$0x1]
        %v258 = vld [vmem:[%s2 + $0x1] sm:$0x1]
        %v259 = vld [vmem:[%s2 + $0x2] sm:$0x1]
        %v260 = vld [vmem:[%s3] sm:$0x1]
        %v261 = vld [vmem:[%s3 + $0x1] sm:$0x1]
        %v262 = vld [vmem:[%s3 + $0x2] sm:$0x1]
        %v263 = vadd.f32 %v260, 1.0
        %v264 = vadd.f32 %v261, 1.0
        %v265 = vadd.f32 %v262, 1.0
        %v266 = vlog2.pop %v263
        %v267 = vmul.f32 %v266, 0.6931472
        %v268 = vlog2.pop %v264
        %v269 = vmul.f32 %v268, 0.6931472
        %v270 = vlog2.pop %v265
        %v271 = vmul.f32 %v270, 0.6931472
        %v272 = vsub.f32 %v257, %v267
        %v273 = vsub.f32 %v258, %v269
        %v274 = vsub.f32 %v259, %v271
        %v275 = vmul.f32 %v272, %v272
        %v276 = vmul.f32 %v273, %v273
        %v277 = vmul.f32 %v274, %v274
        %v278 = vadd.f32 %v275, 0.0
        %v279 = vadd.f32 %v276, 0.0
        %v280 = vadd.f32 %v277, 0.0
        %v284 = vcombine.low %v278, %v279
        %v286 = vunpack.c.l.s4 1966171168
        %v287 = vunpack.c.0.s8 %v286
        %v288 = vlaneseq
        %v289 = vshrl.u32 %v288, 7
        %v290 = vsub.s32 %v287, %v289
        %v291 = vrot.slane %v284, %v290
        %v293 = vunpack.c.l.s4 1966171168
        %v294 = vunpack.c.0.s8 %v293
        %v295 = vlaneseq
        %v296 = vshrl.u32 %v295, 7
        %v297 = vsub.s32 %v294, %v296
        %v298 = vrot.slane %v280, %v297
        %v299 = vcombine.low %v291, %v298
        %v301 = vunpack.c.l.s4 1966171168
        %v302 = vunpack.c.0.s8 %v301
        %v303 = vlaneseq
        %v304 = vshrl.u32 %v303, 7
        %v305 = vsub.s32 %v302, %v304
        %v306 = vrot.slane %v299, %v305
        %308 = vst [vmem:[%s237 + $0x8] sm:$0x7] %v306
      $region44: #{fastspeech2_loss.1} parent=35 // pred_fallthru
        _
      %p309 = scmp.lt.s32.totalorder %s19, 1
      %s310 = scalar_select %p309, %s19, 1
      %s311 = smul.addr %s310, 2
      %s312 = smul.addr %s311, 8
      %s313 = scalar_lea.vmem %s4, %s312
      // Predicated region
      $region45: #{fastspeech2_loss.1} parent=35 // pred_check
        %p314 = pneg %p143
      $region46: #{fastspeech2_loss.1} parent=35 // pred_check_branch
        %316 = sbr.rel (%p314) target = $region48
      $region47: #{fastspeech2_loss.1} parent=35 // pred_region
        _
      $region48: #{fastspeech2_loss.1} parent=35 // pred_fallthru
        _
    $region36: #{fastspeech2_loss.1} parent=5 // pred_fallthru
      _
    %p317 = scmp.le.s32.totalorder 2, %s10
    // Predicated region
    $region49: #{fastspeech2_loss.1} parent=5 // pred_check
      %p318 = pneg %p317
    $region50: #{fastspeech2_loss.1} parent=5 // pred_check_branch
      %320 = sbr.rel (%p318) target = $region52
    $region51: #{fastspeech2_loss.1} parent=5 // pred_region
      %s321 = ssub.s32 %s10, 2
      // Predicated region
      $region53: #{fastspeech2_loss.1} parent=51 // pred_check
        %p322 = pneg %p149
      $region54: #{fastspeech2_loss.1} parent=51 // pred_check_branch
        %324 = sbr.rel (%p322) target = $region56
      $region55: #{fastspeech2_loss.1} parent=51 // pred_region
        %p325 = scmp.lt.s32.totalorder %s21, 1
        %s326 = scalar_select %p325, %s21, 1
        %s327 = smul.addr %s326, 2
        %s328 = smul.addr %s327, 8
        %s329 = scalar_lea.vmem %s4, %s328
      $region56: #{fastspeech2_loss.1} parent=51 // pred_fallthru
        _
    $region52: #{fastspeech2_loss.1} parent=5 // pred_fallthru
      _
  $region6: #{fastspeech2_loss.1} parent=0 // loop_footer
    %s14 = sadd.s32 1, %s10
  $region7: #{fastspeech2_loss.1} parent=0 // loop_footer_branch
    %9 = sbr.rel target = $region3
  $region8: #{fastspeech2_loss.1} parent=0 // loop_exit
    _

</llo_original>
